<compile_context>
chip_gen: v7x
topology: tpu7x:2x2x1
jax: 0.10.0
libtpu: 0.0.40
codegen_flags: <defaults>
</compile_context>

<pallas_src>
import jax
import jax.numpy as jnp
from jax.experimental import pallas as pl
from jax.experimental.pallas import tpu as pltpu


def _fused_kernel(x_ref, w_ref, o_ref):
    """One grid step = one lane-column tile of the fused forward.

    x_ref : (K, tc)  bf16   K = T*D on sublanes, tc columns (= batch*node) on lanes
    w_ref : (K, R)   f32    combined weight, R = H*O (tiny, VMEM-resident, constant index)
    o_ref : (R, tc)  f32    output tile (lane-dense, tc is a multiple of 128)
    """
    x = x_ref[...].astype(jnp.float32)   # f32 VPU math (v5e has no bf16 VALU); accumulate in f32
    w = w_ref[...]                       # (K, R), tiny
    rows = []
    for r in range(o_ref.shape[0]):      # R is small & static -> unrolled
        # broadcast-FMA over the lane slab + sublane (XLU) reduction; no MXU weight pushes of x
        rows.append(jnp.sum(x * w[:, r:r + 1], axis=0, keepdims=True))
    o_ref[...] = jnp.concatenate(rows, axis=0).astype(o_ref.dtype)


class BaseModelPallas:
    # per-grid-step HBM stream target for x (amortizes ~0.35 us fixed per-step overhead)
    _TARGET_X_BLOCK_BYTES = 2 * 1024 * 1024

    def __init__(self, node_num, input_dim, output_dim, seq_len=6, horizon=1):
        self.node_num = node_num
        self.input_dim = input_dim
        self.output_dim = output_dim
        self.seq_len = seq_len
        self.horizon = horizon

        # deterministic synthetic parameters (the abstract base registers none)
        kf, kt = jax.random.split(jax.random.PRNGKey(0))
        self.w_feat = jax.random.normal(
            kf, (input_dim, output_dim), jnp.float32
        ) / jnp.sqrt(jnp.float32(input_dim))
        self.w_time = jax.random.normal(
            kt, (horizon, seq_len), jnp.float32
        ) / jnp.sqrt(jnp.float32(seq_len))

        # dense combined weight: wc[t*D+d, h*O+o] = w_time[h,t] * w_feat[d,o]  -- (T*D, H*O)
        self.w_comb = (
            jnp.einsum("ht,do->tdho", self.w_time, self.w_feat)
            .reshape(seq_len * input_dim, horizon * output_dim)
            .astype(jnp.float32)
        )

    # ---------------------------------------------------------------- helpers
    @staticmethod
    def _vmem_limit_bytes():
        """~75% of physical VMEM (96 MiB on v5e/v6e, 48 MiB on v7x); safe fallback 48 MiB."""
        try:
            cap = int(pltpu.get_tpu_info().vmem_capacity_bytes)
            return max(32 * 1024 * 1024, min(cap * 3 // 4, 96 * 1024 * 1024))
        except Exception:
            return 48 * 1024 * 1024

    def _pick_tile_cols(self, cols, vmem_limit):
        """Column-tile width: multiple of 128, sized from the per-step HBM target and VMEM budget."""
        K = self.seq_len * self.input_dim
        R = self.horizon * self.output_dim
        # per-column VMEM: double-buffered bf16 x block + double-buffered f32 out block
        # + in-kernel f32 copy / product temporaries (~3x K f32)
        bytes_per_col = 2 * (K * 2) + 2 * (R * 4) + 3 * (K * 4)
        cap = max(128, ((vmem_limit // 3) // bytes_per_col) // 128 * 128)
        target = max(128, (self._TARGET_X_BLOCK_BYTES // (K * 2)) // 128 * 128)
        tc = min(target, cap)
        padded_min = pl.cdiv(cols, 128) * 128
        return min(tc, padded_min)

    def param_num(self):
        # mirrors BaseModel.param_num(): total number of parameter elements
        return int(self.w_feat.size + self.w_time.size)

    # ---------------------------------------------------------------- forward
    def forward(self, x, y=None):  # target y accepted and ignored, as in the training-loop API
        B, T, N, D = x.shape
        assert T == self.seq_len and N == self.node_num and D == self.input_dim
        H, O = self.horizon, self.output_dim
        K = T * D          # contraction size (sublane axis)
        R = H * O          # output rows
        cols = B * N       # lane axis: batches folded with nodes

        # wrapper-side layout plumbing (per review): (t,d) on sublanes, batch*node on lanes,
        # activations streamed as bf16 (halves dominant HBM traffic)
        xk = jnp.transpose(x.astype(jnp.bfloat16), (1, 3, 0, 2)).reshape(K, cols)

        vmem_limit = self._vmem_limit_bytes()
        tc = self._pick_tile_cols(cols, vmem_limit)
        padded = pl.cdiv(cols, tc) * tc
        if padded != cols:
            # zero-pad lanes up to the tile width -> lane-dense, unmasked stores; padded
            # columns produce garbage-free zeros and are sliced off below
            xk = jnp.pad(xk, ((0, 0), (0, padded - cols)))
        grid = (padded // tc,)

        cost = pl.CostEstimate(
            flops=2 * B * N * H * O * T * D,
            transcendentals=0,
            bytes_accessed=int(xk.size) * 2 + int(padded) * R * 4 + int(self.w_comb.size) * 4,
        )

        out2 = pl.pallas_call(
            _fused_kernel,
            out_shape=jax.ShapeDtypeStruct((R, padded), jnp.float32),
            grid=grid,
            in_specs=[
                pl.BlockSpec((K, tc), lambda j: (0, j)),   # streamed x tile
                pl.BlockSpec((K, R), lambda j: (0, 0)),    # tiny combined weight, resident
            ],
            out_specs=pl.BlockSpec((R, tc), lambda j: (0, j)),
            compiler_params=pltpu.CompilerParams(
                dimension_semantics=("parallel",),         # splits across v7x's 2 TCs when >1 tile
                vmem_limit_bytes=vmem_limit,
            ),
            cost_estimate=cost,
        )(xk, self.w_comb)

        # (H*O, B*N) -> (B, H, N, O); tiny output, cheap relayout
        return out2[:, :cols].reshape(H, O, B, N).transpose(2, 0, 3, 1)


if __name__ == "__main__":
    B, N, D, O, T, H = 2, 16, 4, 2, 6, 1
    model = BaseModelPallas(node_num=N, input_dim=D, output_dim=O, seq_len=T, horizon=H)

    key = jax.random.PRNGKey(0)
    kx, ky = jax.random.split(key)
    # activations stored/fed as bf16 (halves dominant HBM traffic); kernel math is f32
    x = jax.random.normal(kx, (B, T, N, D), jnp.float32).astype(jnp.bfloat16)
    y = jax.random.normal(ky, (B, H, N, O), jnp.float32)  # target, unused in forward

    out = model.forward(x, y)
    jax.block_until_ready(out)

    # pure-JAX f32 reference computed from the same bf16 activations
    ref = jnp.einsum(
        "ht,btnd,do->bhno", model.w_time, x.astype(jnp.float32), model.w_feat
    )
    assert out.shape == (B, H, N, O), out.shape
    assert jnp.allclose(out, ref, atol=1e-3, rtol=1e-3), "mismatch vs reference"
    assert model.param_num() == D * O + H * T

    print("KERNEL_OK")
</pallas_src>

<mosaic_0001>
module attributes {stable_mosaic.version = 11 : i64} {
  func.func @_fused_kernel(%arg0: i32, %arg1: memref<24x128xbf16, #tpu.memory_space<vmem>>, %arg2: memref<24x2xf32, #tpu.memory_space<vmem>>, %arg3: memref<2x128xf32, #tpu.memory_space<vmem>>) attributes {dimension_semantics = [#tpu.dimension_semantics<parallel>], iteration_bounds = array<i64: 1>, scalar_prefetch = 0 : i64, scratch_operands = 0 : i64, tpu.core_type = #tpu.core_type<tc>, window_params = [{transform_indices = @transform_0, window_bounds = array<i64: 24, 128>}, {pipeline_mode = #tpu.pipeline_mode<synchronous>, transform_indices = @transform_1, window_bounds = array<i64: 24, 2>}, {transform_indices = @transform_2, window_bounds = array<i64: 2, 128>}]} {
    %c0 = arith.constant 0 : index
    %c0_0 = arith.constant 0 : index
    %0 = vector.load %arg1[%c0, %c0_0] : memref<24x128xbf16, #tpu.memory_space<vmem>>, vector<24x128xbf16>
    %1 = arith.extf %0 : vector<24x128xbf16> to vector<24x128xf32>
    %c0_1 = arith.constant 0 : index
    %c0_2 = arith.constant 0 : index
    %2 = vector.load %arg2[%c0_1, %c0_2] : memref<24x2xf32, #tpu.memory_space<vmem>>, vector<24x2xf32>
    %3 = vector.extract_strided_slice %2 {offsets = [0, 0], sizes = [24, 1], strides = [1, 1]} : vector<24x2xf32> to vector<24x1xf32>
    %4 = vector.broadcast %3 : vector<24x1xf32> to vector<24x128xf32>
    %5 = arith.mulf %1, %4 : vector<24x128xf32>
    %cst = arith.constant dense<0.000000e+00> : vector<128xf32>
    %6 = vector.multi_reduction <add>, %5, %cst [0] : vector<24x128xf32> to vector<128xf32>
    %7 = vector.shape_cast %6 : vector<128xf32> to vector<1x128xf32>
    %8 = vector.extract_strided_slice %2 {offsets = [0, 1], sizes = [24, 1], strides = [1, 1]} : vector<24x2xf32> to vector<24x1xf32>
    %9 = vector.broadcast %8 : vector<24x1xf32> to vector<24x128xf32>
    %10 = arith.mulf %1, %9 : vector<24x128xf32>
    %cst_3 = arith.constant dense<0.000000e+00> : vector<128xf32>
    %11 = vector.multi_reduction <add>, %10, %cst_3 [0] : vector<24x128xf32> to vector<128xf32>
    %12 = vector.shape_cast %11 : vector<128xf32> to vector<1x128xf32>
    %13 = tpu.concatenate %7, %12 in 0 : vector<1x128xf32>, vector<1x128xf32> -> vector<2x128xf32>
    %c0_4 = arith.constant 0 : index
    %c0_5 = arith.constant 0 : index
    %14 = vector.load %arg3[%c0_4, %c0_5] : memref<2x128xf32, #tpu.memory_space<vmem>>, vector<2x128xf32>
    tpu.vector_store %arg3[%c0_4, %c0_5], %13 {strides = array<i32>} : memref<2x128xf32, #tpu.memory_space<vmem>>, vector<2x128xf32>,
    return
  }
  func.func @transform_0(%arg0: i32) -> (i32, i32) {
    %c0_i32 = arith.constant 0 : i32
    %c0_i32_0 = arith.constant 0 : i32
    return %c0_i32, %arg0 : i32, i32
  }
  func.func @transform_1(%arg0: i32) -> (i32, i32) {
    %c0_i32 = arith.constant 0 : i32
    %c0_i32_0 = arith.constant 0 : i32
    %c0_i32_1 = arith.constant 0 : i32
    return %c0_i32, %c0_i32_0 : i32, i32
  }
  func.func @transform_2(%arg0: i32) -> (i32, i32) {
    %c0_i32 = arith.constant 0 : i32
    %c0_i32_0 = arith.constant 0 : i32
    return %c0_i32, %arg0 : i32, i32
  }
}

</mosaic_0001>

<llo_original>
// kernel: tpu_custom_call.1
$region0: #{tpu_custom_call.1}
  #allocation0 [shape = 'u32[]', space=smem, size = 0x4, offset = 0x4, fixed_abs, tag = 'smem constant byte address 0x4 - core index']
  #allocation1 [shape = 'u32[144,128]{1,0:T(1,128)}', space=vmem, size = 0x12000, scoped, tag = 'internal scratch']
  %s0 = inlined_call_operand.vmem [shape: bf16[24,128], index: 0, kind: input, shape index: {}]
  %s1 = inlined_call_operand.vmem [shape: f32[24,2], index: 1, kind: input, shape index: {}]
  %s2 = inlined_call_operand.hbm [shape: f32[2,128], index: 2, kind: output, shape index: {}]
  %s3 = sld [smem:[#allocation0]]
  $region18: #{tpu_custom_call.1} parent=0
    _
  %s5 = ssub.s32 1, %s3
  %s6 = scalar_select 0, %s5, %s3
  $region1: #{tpu_custom_call.1} parent=0
    #allocation2 [shape = 'u8[1024]{0}', space=vmem, size = 0x400, scoped, tag = 'output window, operand 0, single buffered']
    #allocation3 [shape = 's32[1]{0}', space=sflag, size = 0x4, scoped, tag = 'scoped memory for tpu_custom_call.1']
    %7 = vsyncpa [#allocation3], 0
    // Predicated region
    $region2: #{tpu_custom_call.1} parent=1 // pred_check
      _
    $region3: #{tpu_custom_call.1} parent=1 // pred_check_branch
      %9 = sbr.rel (0) target = $region5
    $region4: #{tpu_custom_call.1} parent=1 // pred_region
      _
    $region5: #{tpu_custom_call.1} parent=1 // pred_fallthru
      _
    // Predicated region
    $region6: #{tpu_custom_call.1} parent=1 // pred_check
      _
    $region7: #{tpu_custom_call.1} parent=1 // pred_check_branch
      %11 = sbr.rel (0) target = $region9
    $region8: #{tpu_custom_call.1} parent=1 // pred_region
      _
    $region9: #{tpu_custom_call.1} parent=1 // pred_fallthru
      _
    %v12 = vld [vmem:[%s0] sm:$0xf]
    %v13 = vld [vmem:[%s0 + $0x4] sm:$0xf]
    %v14 = vld [vmem:[%s0 + $0x8] sm:$0xf]
    %v15 = vunpack.c.l.bf16 %v12
    %v16 = vunpack.c.l.bf16 %v13
    %v17 = vunpack.c.l.bf16 %v14
    %v18 = vld [vmem:[%s1] sm:$0xff]
    %v19 = vld [vmem:[%s1 + $0x8] sm:$0xff]
    %v20 = vld [vmem:[%s1 + $0x10] sm:$0xff]
    %22 = vset.pattern.permute.xlu0 0
    %23 = vperm.xlu0 %22, %v18
    %v24 = vpop.permute.xlu0 %23
    %27 = vset.pattern.permute.xlu0 0
    %28 = vperm.xlu0 %27, %v19
    %v29 = vpop.permute.xlu0 %28
    %32 = vset.pattern.permute.xlu0 0
    %33 = vperm.xlu0 %32, %v20
    %v34 = vpop.permute.xlu0 %33
    %v36 = vmul.f32 %v15, %v24
    %v37 = vmul.f32 %v16, %v29
    %v38 = vmul.f32 %v17, %v34
    %v39 = vadd.f32 %v36, %v37
    %v40 = vadd.f32 %v39, %v38
    %v41 = vrot.slane %v40, 4
    %v42 = vadd.f32 %v40, %v41
    %v43 = vrot.slane %v42, 2
    %v44 = vadd.f32 %v42, %v43
    %v45 = vrot.slane %v44, 1
    %v46 = vadd.f32 %v44, %v45
    %47 = vset.pattern.permute.xlu0 1
    %48 = vperm.xlu0 %47, %v18
    %v49 = vpop.permute.xlu0 %48
    %51 = vset.pattern.permute.xlu0 1
    %52 = vperm.xlu0 %51, %v19
    %v53 = vpop.permute.xlu0 %52
    %55 = vset.pattern.permute.xlu0 1
    %56 = vperm.xlu0 %55, %v20
    %v57 = vpop.permute.xlu0 %56
    %v59 = vmul.f32 %v15, %v49
    %v60 = vmul.f32 %v16, %v53
    %v61 = vmul.f32 %v17, %v57
    %v62 = vadd.f32 %v59, %v60
    %v63 = vadd.f32 %v62, %v61
    %v64 = vrot.slane %v63, 4
    %v65 = vadd.f32 %v63, %v64
    %v66 = vrot.slane %v65, 2
    %v67 = vadd.f32 %v65, %v66
    %v68 = vrot.slane %v67, 1
    %v69 = vadd.f32 %v67, %v68
    %vm70 = vcmask 1040384
    %v71 = vsel %vm70, %v46, %v69
    %72 = vst [vmem:[#allocation2] sm:$0x3] %v71
    // Predicated region
    $region10: #{tpu_custom_call.1} parent=1 // pred_check
      _
    $region11: #{tpu_custom_call.1} parent=1 // pred_check_branch
      %74 = sbr.rel (0) target = $region13
    $region12: #{tpu_custom_call.1} parent=1 // pred_region
      %s76 = ssub.s32 32, 32
      %77 = vsyncadd [#allocation3], %s76
      %s79 = sshll.u32 [#allocation2], 4
      %s80 = int_to_ptr.vmem [resolvable:$true] %s79
      %82 = dma.vmem_to_hbm [thread:$0]  %s80, 32, %s2, [#allocation3]
    $region13: #{tpu_custom_call.1} parent=1 // pred_fallthru
      _
    // Predicated region
    $region14: #{tpu_custom_call.1} parent=1 // pred_check
      _
    $region15: #{tpu_custom_call.1} parent=1 // pred_check_branch
      %84 = sbr.rel (0) target = $region17
    $region16: #{tpu_custom_call.1} parent=1 // pred_region
      %85 = dma.done [#allocation3], 32
    $region17: #{tpu_custom_call.1} parent=1 // pred_fallthru
      _
    %86 = vsyncpa [#allocation3], 1

</llo_original>
